<compile_context>
chip_gen: v6e
topology: v6e:2x2x1
jax: 0.10.0
libtpu: 0.0.40
codegen_flags: <defaults>
</compile_context>

<pallas_src>
import functools
import math

import jax
import jax.numpy as jnp
from jax import lax
from jax.experimental import pallas as pl
from jax.experimental.pallas import tpu as pltpu


def _round_up(x, m):
    return (x + m - 1) // m * m


@functools.lru_cache(maxsize=None)
def _vmem_limit_bytes():
    """Generation-aware VMEM budget (v5e/v6e: 128 MiB phys, v7x: 64 MiB)."""
    cap = 64 * 1024 * 1024
    try:
        cap = int(pltpu.get_tpu_info().vmem_capacity_bytes)
    except Exception:
        pass
    # Leave headroom for Mosaic-internal scratch and output double buffers.
    return int(min(cap - 16 * 1024 * 1024, 100 * 1024 * 1024))


@functools.lru_cache(maxsize=None)
def _default_tile_rows():
    # Bigger row tiles on 128 MiB parts (v5e/v6e); stay at 256 on v7x (64 MiB).
    return 512 if _vmem_limit_bytes() >= 96 * 1024 * 1024 else 256


def _pick_row_tile(rows, tile_rows):
    tile = min(tile_rows, _round_up(rows, 8))
    return _round_up(tile, 8)


# ---------------------------------------------------------------------------
# Kernels
# ---------------------------------------------------------------------------

def _attn_block_kernel(x_ref, g_ref, wqkv_ref, wo_ref, *rest, heads, dim_head,
                       scale, causal, has_bias, eps, compute_dtype):
    """out = x + SelfAttention(T5LayerNorm(x)) for one batch element."""
    if has_bias:
        bias_ref, o_ref = rest
    else:
        (o_ref,) = rest

    x = x_ref[0].astype(jnp.float32)                           # (S, D)
    var = jnp.mean(x * x, axis=-1, keepdims=True)
    xn = x * lax.rsqrt(var + eps) * g_ref[...].astype(jnp.float32)
    xn_c = xn.astype(compute_dtype)

    inner = heads * dim_head
    seq = x.shape[0]

    # Fused, lane-dense QKV projection: one MXU pass with N = 3 * inner.
    qkv = jnp.dot(xn_c, wqkv_ref[...], preferred_element_type=jnp.float32)
    q = qkv[:, :inner] * scale
    k = qkv[:, inner:2 * inner]
    v = qkv[:, 2 * inner:]

    mask_value = jnp.float32(-jnp.finfo(jnp.float32).max)
    if causal:  # hoisted out of the head loop
        row = lax.broadcasted_iota(jnp.int32, (seq, seq), 0)
        col = lax.broadcasted_iota(jnp.int32, (seq, seq), 1)
        causal_mask = col > row
    approx = compute_dtype != jnp.float32

    # TODO(synk): flash-style q/kv tiling (second grid axis + online softmax)
    # so S^2 logits fit v7x VMEM for very long sequences.
    head_outs = []
    for h in range(heads):                                     # static unroll
        sl = slice(h * dim_head, (h + 1) * dim_head)
        q_h = q[:, sl].astype(compute_dtype)
        k_h = k[:, sl].astype(compute_dtype)
        v_h = v[:, sl].astype(compute_dtype)
        sim = lax.dot_general(q_h, k_h, (((1,), (1,)), ((), ())),
                              preferred_element_type=jnp.float32)
        if has_bias:
            sim = sim + bias_ref[h].astype(jnp.float32)
        if causal:
            sim = jnp.where(causal_mask, mask_value, sim)
        sim = sim - jnp.max(sim, axis=-1, keepdims=True)
        p = jnp.exp(sim)
        p = p * pl.reciprocal(jnp.sum(p, axis=-1, keepdims=True), approx=approx)
        head_outs.append(jnp.dot(p.astype(compute_dtype), v_h,
                                 preferred_element_type=jnp.float32))

    # Concatenate heads on the lane axis and do ONE full-K output projection.
    att = jnp.concatenate(head_outs, axis=-1).astype(compute_dtype)
    out = jnp.dot(att, wo_ref[...], preferred_element_type=jnp.float32)
    o_ref[0] = (out + x).astype(o_ref.dtype)


def _ffn_block_kernel(x_ref, g_ref, w01_ref, wo_ref, o_ref, *, inner, eps,
                      compute_dtype):
    """out = x + FeedForward(T5LayerNorm(x)) for a tile of rows."""
    x = x_ref[...].astype(jnp.float32)                         # (TR, D)
    var = jnp.mean(x * x, axis=-1, keepdims=True)
    xn = x * lax.rsqrt(var + eps) * g_ref[...].astype(jnp.float32)
    xn_c = xn.astype(compute_dtype)
    # Fused wi_0 / wi_1 matmul; split on a 128-multiple lane boundary.
    h = jnp.dot(xn_c, w01_ref[...], preferred_element_type=jnp.float32)
    h = (jnp.maximum(h[:, :inner], 0.0) * h[:, inner:]).astype(compute_dtype)
    out = jnp.dot(h, wo_ref[...], preferred_element_type=jnp.float32)
    o_ref[...] = (out + x).astype(o_ref.dtype)


def _rmsnorm_kernel(x_ref, g_ref, o_ref, *, eps):
    x = x_ref[...].astype(jnp.float32)
    var = jnp.mean(x * x, axis=-1, keepdims=True)
    o_ref[...] = (x * lax.rsqrt(var + eps)
                  * g_ref[...].astype(jnp.float32)).astype(o_ref.dtype)


# ---------------------------------------------------------------------------
# Wrappers
# ---------------------------------------------------------------------------

def attn_block(x, gamma, w_qkv, wo, bias, *, heads, dim_head, causal,
               eps=1e-6, compute_dtype=jnp.bfloat16):
    B, S, D = x.shape
    inner = heads * dim_head
    has_bias = bias is not None
    scale = float(dim_head) ** -0.5

    in_specs = [
        pl.BlockSpec((1, S, D), lambda b: (b, 0, 0)),
        pl.BlockSpec((1, D), lambda b: (0, 0)),
        pl.BlockSpec((D, 3 * inner), lambda b: (0, 0)),
        pl.BlockSpec((inner, D), lambda b: (0, 0)),
    ]
    args = [x, gamma, w_qkv, wo]
    if has_bias:
        in_specs.append(pl.BlockSpec((heads, S, S), lambda b: (0, 0, 0)))
        args.append(bias)
    # TODO(synk): pipeline_mode=pl.Buffered(1) on the constant-index weight
    # specs would halve their resident VMEM footprint on v7x.

    cost = pl.CostEstimate(
        flops=int(B * (8 * S * D * inner + 4 * S * S * inner)),
        transcendentals=int(B * (heads * S * S + S)),
        bytes_accessed=int(2 * B * S * D * 4 + 8 * D * inner * 2
                           + (heads * S * S * 2 if has_bias else 0)))

    kernel = functools.partial(
        _attn_block_kernel, heads=heads, dim_head=dim_head, scale=scale,
        causal=causal, has_bias=has_bias, eps=eps, compute_dtype=compute_dtype)

    return pl.pallas_call(
        kernel,
        out_shape=jax.ShapeDtypeStruct((B, S, D), x.dtype),
        grid_spec=pltpu.PrefetchScalarGridSpec(
            num_scalar_prefetch=0,
            grid=(B,),
            in_specs=in_specs,
            out_specs=pl.BlockSpec((1, S, D), lambda b: (b, 0, 0)),
        ),
        compiler_params=pltpu.CompilerParams(
            dimension_semantics=("parallel",),
            vmem_limit_bytes=_vmem_limit_bytes()),
        cost_estimate=cost,
    )(*args)


def ffn_block(x, gamma, w01, wo, *, eps=1e-6, compute_dtype=jnp.bfloat16,
              tile_rows=None):
    B, S, D = x.shape
    inner = w01.shape[1] // 2
    rows = B * S
    tile = _pick_row_tile(rows, tile_rows or _default_tile_rows())
    rows_p = _round_up(rows, tile)
    x2 = x.reshape(rows, D)
    if rows_p != rows:
        x2 = jnp.pad(x2, ((0, rows_p - rows), (0, 0)))

    cost = pl.CostEstimate(
        flops=int(6 * rows * D * inner),
        transcendentals=int(rows),
        bytes_accessed=int(2 * rows * D * 4 + 3 * D * inner * 2))

    kernel = functools.partial(_ffn_block_kernel, inner=inner, eps=eps,
                               compute_dtype=compute_dtype)

    out = pl.pallas_call(
        kernel,
        out_shape=jax.ShapeDtypeStruct((rows_p, D), x.dtype),
        grid_spec=pltpu.PrefetchScalarGridSpec(
            num_scalar_prefetch=0,
            grid=(rows_p // tile,),
            in_specs=[
                pl.BlockSpec((tile, D), lambda i: (i, 0)),
                pl.BlockSpec((1, D), lambda i: (0, 0)),
                pl.BlockSpec((D, 2 * inner), lambda i: (0, 0)),
                pl.BlockSpec((inner, D), lambda i: (0, 0)),
            ],
            out_specs=pl.BlockSpec((tile, D), lambda i: (i, 0)),
        ),
        compiler_params=pltpu.CompilerParams(
            dimension_semantics=("parallel",),
            vmem_limit_bytes=_vmem_limit_bytes()),
        cost_estimate=cost,
    )(x2, gamma, w01, wo)
    # TODO(synk): for very large D*inner add an inner-dim grid axis (with an
    # accumulator) so resident FFN weights fit v7x's 64 MiB VMEM.
    return out[:rows].reshape(B, S, D)


def final_rmsnorm(x, gamma, *, eps=1e-6, tile_rows=None):
    B, S, D = x.shape
    rows = B * S
    tile = _pick_row_tile(rows, tile_rows or _default_tile_rows())
    rows_p = _round_up(rows, tile)
    x2 = x.reshape(rows, D)
    if rows_p != rows:
        x2 = jnp.pad(x2, ((0, rows_p - rows), (0, 0)))
    out = pl.pallas_call(
        functools.partial(_rmsnorm_kernel, eps=eps),
        out_shape=jax.ShapeDtypeStruct((rows_p, D), x.dtype),
        grid_spec=pltpu.PrefetchScalarGridSpec(
            num_scalar_prefetch=0,
            grid=(rows_p // tile,),
            in_specs=[
                pl.BlockSpec((tile, D), lambda i: (i, 0)),
                pl.BlockSpec((1, D), lambda i: (0, 0)),
            ],
            out_specs=pl.BlockSpec((tile, D), lambda i: (i, 0)),
        ),
        compiler_params=pltpu.CompilerParams(
            dimension_semantics=("parallel",),
            vmem_limit_bytes=_vmem_limit_bytes()),
    )(x2, gamma)
    return out[:rows].reshape(B, S, D)


# ---------------------------------------------------------------------------
# Relative position bias (tiny, data-dependent gather -> plain JAX)
# ---------------------------------------------------------------------------

def _relative_position_bucket(relative_position, *, causal, num_buckets,
                              max_distance):
    ret = jnp.zeros_like(relative_position)
    n = -relative_position
    if not causal:
        num_buckets //= 2
        ret = ret + (n < 0).astype(jnp.int32) * num_buckets
        n = jnp.abs(n)
    else:
        n = jnp.maximum(n, 0)
    max_exact = num_buckets // 2
    is_small = n < max_exact
    n_f = jnp.maximum(n, 1).astype(jnp.float32)
    val_if_large = max_exact + (
        jnp.log(n_f / max_exact) / math.log(max_distance / max_exact)
        * (num_buckets - max_exact)).astype(jnp.int32)
    val_if_large = jnp.minimum(val_if_large, num_buckets - 1)
    return ret + jnp.where(is_small, n, val_if_large)


def t5_relative_position_bias(emb, seq_len, *, causal, num_buckets,
                              max_distance, scale):
    q_pos = jnp.arange(seq_len, dtype=jnp.int32)
    k_pos = jnp.arange(seq_len, dtype=jnp.int32)
    rel_pos = k_pos[None, :] - q_pos[:, None]
    rp_bucket = _relative_position_bucket(
        rel_pos, causal=causal, num_buckets=num_buckets,
        max_distance=max_distance)
    values = jnp.take(emb, rp_bucket, axis=0)                  # (S, S, H)
    return jnp.transpose(values, (2, 0, 1)).astype(jnp.float32) * scale


# ---------------------------------------------------------------------------
# Parameter prep (one-time fuse / cast), full forward, pure-JAX reference
# ---------------------------------------------------------------------------

def prepare_t5_params(params, *, heads, dim_head, compute_dtype=jnp.bfloat16):
    """Fuse QKV / wi_0+wi_1 and cast weights to the MXU compute dtype once."""
    D = params["token_emb"].shape[1]
    prep = {
        "token_emb": params["token_emb"],
        "rel_pos_emb": params["rel_pos_emb"],
        "final_norm_g": params["final_norm_g"].reshape(1, D),
        "layers": [],
    }
    for layer in params["layers"]:
        w_qkv = jnp.concatenate(
            [layer["wq"], layer["wk"], layer["wv"]], axis=1).astype(compute_dtype)
        w01 = jnp.concatenate(
            [layer["w0"], layer["w1"]], axis=1).astype(compute_dtype)
        prep["layers"].append({
            "attn_norm_g": layer["attn_norm_g"].reshape(1, D),
            "w_qkv": w_qkv,
            "wo_attn": layer["wo_attn"].astype(compute_dtype),
            "ffn_norm_g": layer["ffn_norm_g"].reshape(1, D),
            "w01": w01,
            "wo_ffn": layer["wo_ffn"].astype(compute_dtype),
        })
    return prep


def t5_encoder_forward(tokens, prep, *, heads, dim_head, causal=True, eps=1e-6,
                       num_buckets=32, max_distance=128,
                       compute_dtype=jnp.bfloat16, tile_rows=None, mask=None):
    if mask is not None:
        # TODO(synk): key-padding mask path not implemented (module exercised with mask=None).
        raise NotImplementedError("mask is not supported")
    # Token-embedding gather kept in plain JAX (tiny vs. block compute).
    x = jnp.take(prep["token_emb"], tokens, axis=0).astype(jnp.float32)
    _, S, _ = x.shape
    scale = float(dim_head) ** -0.5
    for i, layer in enumerate(prep["layers"]):
        bias = None
        if i == 0:  # relative_position_bias=bool(i == 0) in the PyTorch module
            bias = t5_relative_position_bias(
                prep["rel_pos_emb"], S, causal=causal, num_buckets=num_buckets,
                max_distance=max_distance, scale=scale).astype(compute_dtype)
        x = attn_block(x, layer["attn_norm_g"], layer["w_qkv"],
                       layer["wo_attn"], bias, heads=heads, dim_head=dim_head,
                       causal=causal, eps=eps, compute_dtype=compute_dtype)
        x = ffn_block(x, layer["ffn_norm_g"], layer["w01"], layer["wo_ffn"],
                      eps=eps, compute_dtype=compute_dtype, tile_rows=tile_rows)
    # TODO(synk): optionally carry the residual stream in bf16 between blocks
    # (or fuse attn+FFN per layer) to cut HBM round trips of x.
    return final_rmsnorm(x, prep["final_norm_g"], eps=eps, tile_rows=tile_rows)


def t5_encoder_reference(tokens, params, *, heads, dim_head, causal=True,
                         eps=1e-6, num_buckets=32, max_distance=128,
                         compute_dtype=jnp.bfloat16):
    """Pure-JAX reference mirroring the kernel's MXU precision policy."""
    cd = compute_dtype

    def mm(a, b):
        return jnp.dot(a.astype(cd), b.astype(cd),
                       preferred_element_type=jnp.float32)

    def rmsnorm(h, g):
        hf = h.astype(jnp.float32)
        var = jnp.mean(hf * hf, axis=-1, keepdims=True)
        return hf * lax.rsqrt(var + eps) * g

    x = jnp.take(params["token_emb"], tokens, axis=0).astype(jnp.float32)
    B, S, D = x.shape
    scale = float(dim_head) ** -0.5
    mask_value = jnp.float32(-jnp.finfo(jnp.float32).max)
    causal_mask = jnp.triu(jnp.ones((S, S), dtype=bool), k=1)

    for i, layer in enumerate(params["layers"]):
        xn = rmsnorm(x, layer["attn_norm_g"])
        q = mm(xn, layer["wq"]).reshape(B, S, heads, dim_head).transpose(0, 2, 1, 3)
        k = mm(xn, layer["wk"]).reshape(B, S, heads, dim_head).transpose(0, 2, 1, 3)
        v = mm(xn, layer["wv"]).reshape(B, S, heads, dim_head).transpose(0, 2, 1, 3)
        q = q * scale
        sim = jnp.einsum("bhid,bhjd->bhij", q.astype(cd), k.astype(cd),
                         preferred_element_type=jnp.float32)
        if i == 0:
            bias = t5_relative_position_bias(
                params["rel_pos_emb"], S, causal=causal,
                num_buckets=num_buckets, max_distance=max_distance, scale=scale)
            sim = sim + bias.astype(cd).astype(jnp.float32)[None]
        if causal:
            sim = jnp.where(causal_mask[None, None], mask_value, sim)
        attn = jax.nn.softmax(sim, axis=-1)
        out = jnp.einsum("bhij,bhjd->bhid", attn.astype(cd), v.astype(cd),
                         preferred_element_type=jnp.float32)
        out = out.transpose(0, 2, 1, 3).reshape(B, S, heads * dim_head)
        x = x + mm(out, layer["wo_attn"])

        xn = rmsnorm(x, layer["ffn_norm_g"])
        h = jnp.maximum(mm(xn, layer["w0"]), 0.0) * mm(xn, layer["w1"])
        x = x + mm(h, layer["wo_ffn"])

    return rmsnorm(x, params["final_norm_g"])


# ---------------------------------------------------------------------------
# Self-test
# ---------------------------------------------------------------------------

if __name__ == "__main__":
    num_tokens, dim, depth = 32, 64, 2
    heads, dim_head, mlp_mult = 2, 16, 4
    B, S = 2, 8
    inner = heads * dim_head
    ffn_inner = dim * mlp_mult

    key = jax.random.PRNGKey(0)
    key_iter = iter(jax.random.split(key, 4 + depth * 7))

    def nk():
        return next(key_iter)

    def dense(k, fan_in, fan_out):
        return jax.random.normal(k, (fan_in, fan_out), jnp.float32) / math.sqrt(fan_in)

    params = {
        "token_emb": jax.random.normal(nk(), (num_tokens, dim), jnp.float32),
        "rel_pos_emb": 0.1 * jax.random.normal(nk(), (32, heads), jnp.float32),
        "final_norm_g": jnp.ones((dim,), jnp.float32),
        "layers": [],
    }
    for _ in range(depth):
        params["layers"].append({
            "attn_norm_g": jnp.ones((dim,), jnp.float32),
            "wq": dense(nk(), dim, inner),
            "wk": dense(nk(), dim, inner),
            "wv": dense(nk(), dim, inner),
            "wo_attn": dense(nk(), inner, dim),
            "ffn_norm_g": jnp.ones((dim,), jnp.float32),
            "w0": dense(nk(), dim, ffn_inner),
            "w1": dense(nk(), dim, ffn_inner),
            "wo_ffn": dense(nk(), ffn_inner, dim),
        })

    tokens = jax.random.randint(nk(), (B, S), 0, num_tokens)

    # --- f32 compute path vs f32 reference ---------------------------------
    prep32 = prepare_t5_params(params, heads=heads, dim_head=dim_head,
                               compute_dtype=jnp.float32)
    y32 = t5_encoder_forward(tokens, prep32, heads=heads, dim_head=dim_head,
                             causal=True, compute_dtype=jnp.float32)
    y32 = jax.block_until_ready(y32)
    ref32 = t5_encoder_reference(tokens, params, heads=heads, dim_head=dim_head,
                                 causal=True, compute_dtype=jnp.float32)
    ref32 = jax.block_until_ready(ref32)
    assert y32.shape == (B, S, dim)
    assert bool(jnp.all(jnp.isfinite(y32)))
    err32 = float(jnp.max(jnp.abs(y32 - ref32)))
    assert err32 < 2e-2, f"f32 mismatch vs reference: max abs err = {err32}"

    # --- production bf16-MXU path vs precision-matched reference -----------
    prep16 = prepare_t5_params(params, heads=heads, dim_head=dim_head,
                               compute_dtype=jnp.bfloat16)
    y16 = t5_encoder_forward(tokens, prep16, heads=heads, dim_head=dim_head,
                             causal=True, compute_dtype=jnp.bfloat16)
    y16 = jax.block_until_ready(y16)
    ref16 = t5_encoder_reference(tokens, params, heads=heads, dim_head=dim_head,
                                 causal=True, compute_dtype=jnp.bfloat16)
    ref16 = jax.block_until_ready(ref16)
    assert bool(jnp.all(jnp.isfinite(y16)))
    err16 = float(jnp.max(jnp.abs(y16 - ref16)))
    assert err16 < 3e-2, f"bf16 mismatch vs reference: max abs err = {err16}"

    print("KERNEL_OK")
</pallas_src>

<mosaic_0001>
module attributes {stable_mosaic.version = 11 : i64} {
  func.func @_attn_block_kernel(%arg0: i32, %arg1: memref<1x8x64xf32, #tpu.memory_space<vmem>>, %arg2: memref<1x64xf32, #tpu.memory_space<vmem>>, %arg3: memref<64x96xf32, #tpu.memory_space<vmem>>, %arg4: memref<32x64xf32, #tpu.memory_space<vmem>>, %arg5: memref<2x8x8xf32, #tpu.memory_space<vmem>>, %arg6: memref<1x8x64xf32, #tpu.memory_space<vmem>>) attributes {dimension_semantics = [#tpu.dimension_semantics<parallel>], iteration_bounds = array<i64: 2>, scalar_prefetch = 0 : i64, scratch_operands = 0 : i64, tpu.core_type = #tpu.core_type<tc>, window_params = [{transform_indices = @transform_0, window_bounds = array<i64: 1, 8, 64>}, {pipeline_mode = #tpu.pipeline_mode<synchronous>, transform_indices = @transform_1, window_bounds = array<i64: 1, 64>}, {pipeline_mode = #tpu.pipeline_mode<synchronous>, transform_indices = @transform_2, window_bounds = array<i64: 64, 96>}, {pipeline_mode = #tpu.pipeline_mode<synchronous>, transform_indices = @transform_3, window_bounds = array<i64: 32, 64>}, {pipeline_mode = #tpu.pipeline_mode<synchronous>, transform_indices = @transform_4, window_bounds = array<i64: 2, 8, 8>}, {transform_indices = @transform_5, window_bounds = array<i64: 1, 8, 64>}]} {
    %c0 = arith.constant 0 : index
    %c0_0 = arith.constant 0 : index
    %c0_1 = arith.constant 0 : index
    %0 = vector.load %arg1[%c0, %c0_0, %c0_1] : memref<1x8x64xf32, #tpu.memory_space<vmem>>, vector<1x8x64xf32>
    %1 = vector.shape_cast %0 : vector<1x8x64xf32> to vector<8x64xf32>
    %2 = arith.mulf %1, %1 : vector<8x64xf32>
    %cst = arith.constant dense<0.000000e+00> : vector<8xf32>
    %3 = vector.multi_reduction <add>, %2, %cst [1] : vector<8x64xf32> to vector<8xf32>
    %4 = vector.shape_cast %3 : vector<8xf32> to vector<8x1xf32>
    %cst_2 = arith.constant 6.400000e+01 : f32
    %5 = vector.broadcast %cst_2 : f32 to vector<8x1xf32>
    %6 = arith.divf %4, %5 : vector<8x1xf32>
    %cst_3 = arith.constant 9.99999997E-7 : f32
    %7 = vector.broadcast %cst_3 : f32 to vector<8x1xf32>
    %8 = arith.addf %6, %7 : vector<8x1xf32>
    %9 = math.rsqrt %8 : vector<8x1xf32>
    %10 = vector.broadcast %9 : vector<8x1xf32> to vector<8x64xf32>
    %11 = arith.mulf %1, %10 : vector<8x64xf32>
    %c0_4 = arith.constant 0 : index
    %c0_5 = arith.constant 0 : index
    %12 = vector.load %arg2[%c0_4, %c0_5] : memref<1x64xf32, #tpu.memory_space<vmem>>, vector<1x64xf32>
    %13 = vector.broadcast %12 : vector<1x64xf32> to vector<8x64xf32>
    %14 = arith.mulf %11, %13 : vector<8x64xf32>
    %c0_6 = arith.constant 0 : index
    %c0_7 = arith.constant 0 : index
    %15 = vector.load %arg3[%c0_6, %c0_7] : memref<64x96xf32, #tpu.memory_space<vmem>>, vector<64x96xf32>
    %cst_8 = arith.constant dense<0.000000e+00> : vector<8x96xf32>
    %16 = tpu.matmul %14, %15, %cst_8 {dimension_numbers = #tpu.dot_dimension_numbers<[1], [0], [0], [1], [0, 0, 1, 1], [], []>} : vector<8x64xf32>, vector<64x96xf32>, vector<8x96xf32> -> vector<8x96xf32>
    %17 = vector.extract_strided_slice %16 {offsets = [0, 0], sizes = [8, 32], strides = [1, 1]} : vector<8x96xf32> to vector<8x32xf32>
    %cst_9 = arith.constant 2.500000e-01 : f32
    %18 = vector.broadcast %cst_9 : f32 to vector<8x32xf32>
    %19 = arith.mulf %17, %18 : vector<8x32xf32>
    %20 = vector.extract_strided_slice %16 {offsets = [0, 32], sizes = [8, 32], strides = [1, 1]} : vector<8x96xf32> to vector<8x32xf32>
    %21 = vector.extract_strided_slice %16 {offsets = [0, 64], sizes = [8, 32], strides = [1, 1]} : vector<8x96xf32> to vector<8x32xf32>
    %22 = tpu.iota {dimensions = array<i32: 0>} : vector<8x8xi32>
    %23 = tpu.iota {dimensions = array<i32: 1>} : vector<8x8xi32>
    %24 = arith.cmpi sgt, %23, %22 : vector<8x8xi32>
    %25 = vector.extract_strided_slice %19 {offsets = [0, 0], sizes = [8, 16], strides = [1, 1]} : vector<8x32xf32> to vector<8x16xf32>
    %26 = vector.extract_strided_slice %20 {offsets = [0, 0], sizes = [8, 16], strides = [1, 1]} : vector<8x32xf32> to vector<8x16xf32>
    %27 = vector.extract_strided_slice %21 {offsets = [0, 0], sizes = [8, 16], strides = [1, 1]} : vector<8x32xf32> to vector<8x16xf32>
    %cst_10 = arith.constant dense<0.000000e+00> : vector<8x8xf32>
    %28 = tpu.matmul %25, %26, %cst_10 {dimension_numbers = #tpu.dot_dimension_numbers<[1], [1], [0], [0], [0, 0, 1, 0], [], []>} : vector<8x16xf32>, vector<8x16xf32>, vector<8x8xf32> -> vector<8x8xf32>
    %c0_11 = arith.constant 0 : index
    %c0_12 = arith.constant 0 : index
    %c0_13 = arith.constant 0 : index
    %29 = vector.load %arg5[%c0_11, %c0_12, %c0_13] : memref<2x8x8xf32, #tpu.memory_space<vmem>>, vector<1x8x8xf32>
    %30 = vector.shape_cast %29 : vector<1x8x8xf32> to vector<8x8xf32>
    %31 = arith.addf %28, %30 : vector<8x8xf32>
    %cst_14 = arith.constant -3.40282347E+38 : f32
    %32 = vector.broadcast %cst_14 : f32 to vector<8x8xf32>
    %33 = arith.select %24, %32, %31 : vector<8x8xi1>, vector<8x8xf32>
    %cst_15 = arith.constant dense<0xFF800000> : vector<8xf32>
    %34 = vector.multi_reduction <maximumf>, %33, %cst_15 [1] : vector<8x8xf32> to vector<8xf32>
    %35 = vector.shape_cast %34 : vector<8xf32> to vector<8x1xf32>
    %36 = vector.broadcast %35 : vector<8x1xf32> to vector<8x8xf32>
    %37 = arith.subf %33, %36 : vector<8x8xf32>
    %38 = math.exp %37 : vector<8x8xf32>
    %cst_16 = arith.constant dense<0.000000e+00> : vector<8xf32>
    %39 = vector.multi_reduction <add>, %38, %cst_16 [1] : vector<8x8xf32> to vector<8xf32>
    %40 = vector.shape_cast %39 : vector<8xf32> to vector<8x1xf32>
    %41 = tpu.reciprocal %40 : vector<8x1xf32> -> vector<8x1xf32>
    %42 = vector.broadcast %41 : vector<8x1xf32> to vector<8x8xf32>
    %43 = arith.mulf %38, %42 : vector<8x8xf32>
    %cst_17 = arith.constant dense<0.000000e+00> : vector<8x16xf32>
    %44 = tpu.matmul %43, %27, %cst_17 {dimension_numbers = #tpu.dot_dimension_numbers<[1], [0], [0], [1], [0, 0, 1, 1], [], []>} : vector<8x8xf32>, vector<8x16xf32>, vector<8x16xf32> -> vector<8x16xf32>
    %45 = vector.extract_strided_slice %19 {offsets = [0, 16], sizes = [8, 16], strides = [1, 1]} : vector<8x32xf32> to vector<8x16xf32>
    %46 = vector.extract_strided_slice %20 {offsets = [0, 16], sizes = [8, 16], strides = [1, 1]} : vector<8x32xf32> to vector<8x16xf32>
    %47 = vector.extract_strided_slice %21 {offsets = [0, 16], sizes = [8, 16], strides = [1, 1]} : vector<8x32xf32> to vector<8x16xf32>
    %cst_18 = arith.constant dense<0.000000e+00> : vector<8x8xf32>
    %48 = tpu.matmul %45, %46, %cst_18 {dimension_numbers = #tpu.dot_dimension_numbers<[1], [1], [0], [0], [0, 0, 1, 0], [], []>} : vector<8x16xf32>, vector<8x16xf32>, vector<8x8xf32> -> vector<8x8xf32>
    %c1 = arith.constant 1 : index
    %c0_19 = arith.constant 0 : index
    %c0_20 = arith.constant 0 : index
    %49 = vector.load %arg5[%c1, %c0_19, %c0_20] : memref<2x8x8xf32, #tpu.memory_space<vmem>>, vector<1x8x8xf32>
    %50 = vector.shape_cast %49 : vector<1x8x8xf32> to vector<8x8xf32>
    %51 = arith.addf %48, %50 : vector<8x8xf32>
    %cst_21 = arith.constant -3.40282347E+38 : f32
    %52 = vector.broadcast %cst_21 : f32 to vector<8x8xf32>
    %53 = arith.select %24, %52, %51 : vector<8x8xi1>, vector<8x8xf32>
    %cst_22 = arith.constant dense<0xFF800000> : vector<8xf32>
    %54 = vector.multi_reduction <maximumf>, %53, %cst_22 [1] : vector<8x8xf32> to vector<8xf32>
    %55 = vector.shape_cast %54 : vector<8xf32> to vector<8x1xf32>
    %56 = vector.broadcast %55 : vector<8x1xf32> to vector<8x8xf32>
    %57 = arith.subf %53, %56 : vector<8x8xf32>
    %58 = math.exp %57 : vector<8x8xf32>
    %cst_23 = arith.constant dense<0.000000e+00> : vector<8xf32>
    %59 = vector.multi_reduction <add>, %58, %cst_23 [1] : vector<8x8xf32> to vector<8xf32>
    %60 = vector.shape_cast %59 : vector<8xf32> to vector<8x1xf32>
    %61 = tpu.reciprocal %60 : vector<8x1xf32> -> vector<8x1xf32>
    %62 = vector.broadcast %61 : vector<8x1xf32> to vector<8x8xf32>
    %63 = arith.mulf %58, %62 : vector<8x8xf32>
    %cst_24 = arith.constant dense<0.000000e+00> : vector<8x16xf32>
    %64 = tpu.matmul %63, %47, %cst_24 {dimension_numbers = #tpu.dot_dimension_numbers<[1], [0], [0], [1], [0, 0, 1, 1], [], []>} : vector<8x8xf32>, vector<8x16xf32>, vector<8x16xf32> -> vector<8x16xf32>
    %65 = tpu.concatenate %44, %64 in 1 : vector<8x16xf32>, vector<8x16xf32> -> vector<8x32xf32>
    %c0_25 = arith.constant 0 : index
    %c0_26 = arith.constant 0 : index
    %66 = vector.load %arg4[%c0_25, %c0_26] : memref<32x64xf32, #tpu.memory_space<vmem>>, vector<32x64xf32>
    %cst_27 = arith.constant dense<0.000000e+00> : vector<8x64xf32>
    %67 = tpu.matmul %65, %66, %cst_27 {dimension_numbers = #tpu.dot_dimension_numbers<[1], [0], [0], [1], [0, 0, 1, 1], [], []>} : vector<8x32xf32>, vector<32x64xf32>, vector<8x64xf32> -> vector<8x64xf32>
    %68 = arith.addf %67, %1 : vector<8x64xf32>
    %c0_28 = arith.constant 0 : index
    %c0_29 = arith.constant 0 : index
    %c0_30 = arith.constant 0 : index
    %69 = vector.load %arg6[%c0_28, %c0_29, %c0_30] : memref<1x8x64xf32, #tpu.memory_space<vmem>>, vector<1x8x64xf32>
    %70 = vector.shape_cast %69 : vector<1x8x64xf32> to vector<8x64xf32>
    %71 = vector.shape_cast %68 : vector<8x64xf32> to vector<1x8x64xf32>
    tpu.vector_store %arg6[%c0_28, %c0_29, %c0_30], %71 {strides = array<i32>} : memref<1x8x64xf32, #tpu.memory_space<vmem>>, vector<1x8x64xf32>,
    return
  }
  func.func @transform_0(%arg0: i32) -> (i32, i32, i32) {
    %c0_i32 = arith.constant 0 : i32
    %c0_i32_0 = arith.constant 0 : i32
    %c0_i32_1 = arith.constant 0 : i32
    return %arg0, %c0_i32, %c0_i32_0 : i32, i32, i32
  }
  func.func @transform_1(%arg0: i32) -> (i32, i32) {
    %c0_i32 = arith.constant 0 : i32
    %c0_i32_0 = arith.constant 0 : i32
    %c0_i32_1 = arith.constant 0 : i32
    return %c0_i32, %c0_i32_0 : i32, i32
  }
  func.func @transform_2(%arg0: i32) -> (i32, i32) {
    %c0_i32 = arith.constant 0 : i32
    %c0_i32_0 = arith.constant 0 : i32
    %c0_i32_1 = arith.constant 0 : i32
    return %c0_i32, %c0_i32_0 : i32, i32
  }
  func.func @transform_3(%arg0: i32) -> (i32, i32) {
    %c0_i32 = arith.constant 0 : i32
    %c0_i32_0 = arith.constant 0 : i32
    %c0_i32_1 = arith.constant 0 : i32
    return %c0_i32, %c0_i32_0 : i32, i32
  }
  func.func @transform_4(%arg0: i32) -> (i32, i32, i32) {
    %c0_i32 = arith.constant 0 : i32
    %c0_i32_0 = arith.constant 0 : i32
    %c0_i32_1 = arith.constant 0 : i32
    %c0_i32_2 = arith.constant 0 : i32
    return %c0_i32, %c0_i32_0, %c0_i32_1 : i32, i32, i32
  }
  func.func @transform_5(%arg0: i32) -> (i32, i32, i32) {
    %c0_i32 = arith.constant 0 : i32
    %c0_i32_0 = arith.constant 0 : i32
    %c0_i32_1 = arith.constant 0 : i32
    return %arg0, %c0_i32, %c0_i32_0 : i32, i32, i32
  }
}

</mosaic_0001>

<llo_original>
// kernel: tpu_custom_call.1
$region0: #{tpu_custom_call.1}
  #allocation0 [shape = 'u32[]', space=smem, size = 0x4, offset = 0x4, fixed_abs, tag = 'smem constant byte address 0x4 - core index']
  #allocation1 [shape = 'u32[144,128]{1,0:T(1,128)}', space=vmem, size = 0x12000, scoped, tag = 'internal scratch']
  %s0 = inlined_call_operand.hbm [shape: f32[2,8,64], index: 0, kind: input, shape index: {}]
  %s1 = inlined_call_operand.vmem [shape: f32[1,64], index: 1, kind: input, shape index: {}]
  %s2 = inlined_call_operand.hbm [shape: f32[64,96], index: 2, kind: input, shape index: {}]
  %s3 = inlined_call_operand.hbm [shape: f32[32,64], index: 3, kind: input, shape index: {}]
  %s4 = inlined_call_operand.hbm [shape: f32[2,8,8], index: 4, kind: input, shape index: {}]
  %s5 = inlined_call_operand.hbm [shape: f32[2,8,64], index: 5, kind: output, shape index: {}]
  %s6 = sld [smem:[#allocation0]]
  $region69: #{tpu_custom_call.1} parent=0
    _
  %s8 = ssub.s32 1, %s6
  %s9 = scalar_select 0, %s8, %s6
  $region1: #{tpu_custom_call.1} parent=0
    #allocation2 [shape = 'u8[8192]{0}', space=vmem, size = 0x2000, scoped, tag = 'input window, operand 0']
    #allocation3 [shape = 's32[2]{0}', space=sflag, size = 0x8, scoped, tag = 'scoped memory for tpu_custom_call.1']
    #allocation4 [shape = 's32[2]{0}', space=sflag, size = 0x8, scoped, tag = 'scoped memory for tpu_custom_call.1']
    #allocation5 [shape = 'u8[32768]{0}', space=vmem, size = 0x8000, scoped, tag = 'input window, operand 2, single buffered']
    #allocation6 [shape = 's32[1]{0}', space=sflag, size = 0x4, scoped, tag = 'scoped memory for tpu_custom_call.1']
    #allocation7 [shape = 'u8[16384]{0}', space=vmem, size = 0x4000, scoped, tag = 'input window, operand 3, single buffered']
    #allocation8 [shape = 'u8[8192]{0}', space=vmem, size = 0x2000, scoped, tag = 'input window, operand 4, single buffered']
    #allocation9 [shape = 's32[1]{0}', space=sflag, size = 0x4, scoped, tag = 'scoped memory for tpu_custom_call.1']
    #allocation10 [shape = 'u8[8192]{0}', space=vmem, size = 0x2000, scoped, tag = 'output window, operand 0']
    %10 = vsyncpa [#allocation3], 0
    %s11 = scalar_lea.sflag [#allocation3], 1
    %12 = vsyncpa %s11, 0
    %13 = vsyncpa [#allocation6], 0
    %14 = vsyncpa [#allocation9], 0
    %15 = vsyncpa [#allocation4], 0
    %s16 = scalar_lea.sflag [#allocation4], 1
    %17 = vsyncpa %s16, 0
    loop: start=0, step=1, limit=4
    $region2: #{tpu_custom_call.1} parent=1 // loop_pre_header
      _
    $region3: #{tpu_custom_call.1} parent=1 // loop_header
      %s19 = sphi 0, %s23
      %p20 = scmp.ge.s32.totalorder %s19, 4
      %s29 = sphi 0, %s31
      %s32 = sphi 0, %s29
      %s33 = sphi 0, %s32
      %s49 = sphi 0, %s33
      %s53 = sphi 0, %s53
      %s55 = sphi 0, %s53
      %s56 = sphi 0, %s55
      %s70 = sphi 0, %s56
      %s74 = sphi 0, %s74
      %s76 = sphi 0, %s74
      %s77 = sphi 0, %s76
      %s91 = sphi 0, %s77
      %s95 = sphi 0, %s95
      %s97 = sphi 0, %s95
      %s98 = sphi 0, %s97
      %s112 = sphi 0, %s98
      %s116 = sphi 0, %s116
      %s118 = sphi 0, %s116
      %s119 = sphi 0, %s118
      %s133 = sphi 0, %s119
      %s139 = sphi 0, %s141
      %s142 = sphi 0, %s139
      %s143 = sphi 0, %s142
      %s159 = sphi 0, %s143
    $region4: #{tpu_custom_call.1} parent=1 // loop_header_branch
      %22 = sbr.rel (%p20) target = $region8
    $region5: #{tpu_custom_call.1} parent=1 // loop_body
      %s24 = ssub.s32 %s19, 1
      %s25 = ssub.s32 %s19, 2
      %s26 = sadd.s32 %s19, 1
      %s27 = ssub.s32 %s19, %s26
      %p28 = scmp.eq.s32.totalorder %s27, 0
      %s30 = sadd.s32 %s29, 1
      %s31 = scalar_select %p28, %s29, %s30
      %p34 = pneg %p28
      %p35 = scmp.eq.s32.totalorder %s19, 1
      %p36 = por %p34, %p35
      %p37 = scmp.ne.s32.totalorder %s29, %s32
      %p38 = scmp.eq.s32.totalorder %s19, 0
      %p39 = por %p37, %p38
      %p40 = scmp.ne.s32.totalorder %s29, %s32
      %p41 = scmp.eq.s32.totalorder %s24, 1
      %p42 = por %p40, %p41
      %p43 = scmp.ne.s32.totalorder %s32, %s33
      %p44 = scmp.eq.s32.totalorder %s24, 0
      %p45 = por %p43, %p44
      %p46 = scmp.ne.s32.totalorder %s32, %s33
      %p47 = scmp.eq.s32.totalorder %s25, 1
      %p48 = por %p46, %p47
      %p50 = scmp.ne.s32.totalorder %s33, %s49
      %p51 = scmp.eq.s32.totalorder %s25, 0
      %p52 = por %p50, %p51
      %s54 = sadd.s32 %s53, 1
      %p57 = scmp.eq.s32.totalorder %s19, 1
      %p58 = scmp.ne.s32.totalorder %s53, %s55
      %p59 = scmp.eq.s32.totalorder %s19, 0
      %p60 = por %p58, %p59
      %p61 = scmp.ne.s32.totalorder %s53, %s55
      %p62 = scmp.eq.s32.totalorder %s24, 1
      %p63 = por %p61, %p62
      %p64 = scmp.ne.s32.totalorder %s55, %s56
      %p65 = scmp.eq.s32.totalorder %s24, 0
      %p66 = por %p64, %p65
      %p67 = scmp.ne.s32.totalorder %s55, %s56
      %p68 = scmp.eq.s32.totalorder %s25, 1
      %p69 = por %p67, %p68
      %p71 = scmp.ne.s32.totalorder %s56, %s70
      %p72 = scmp.eq.s32.totalorder %s25, 0
      %p73 = por %p71, %p72
      %s75 = sadd.s32 %s74, 1
      %p78 = scmp.eq.s32.totalorder %s19, 1
      %p79 = scmp.ne.s32.totalorder %s74, %s76
      %p80 = scmp.eq.s32.totalorder %s19, 0
      %p81 = por %p79, %p80
      %p82 = scmp.ne.s32.totalorder %s74, %s76
      %p83 = scmp.eq.s32.totalorder %s24, 1
      %p84 = por %p82, %p83
      %p85 = scmp.ne.s32.totalorder %s76, %s77
      %p86 = scmp.eq.s32.totalorder %s24, 0
      %p87 = por %p85, %p86
      %p88 = scmp.ne.s32.totalorder %s76, %s77
      %p89 = scmp.eq.s32.totalorder %s25, 1
      %p90 = por %p88, %p89
      %p92 = scmp.ne.s32.totalorder %s77, %s91
      %p93 = scmp.eq.s32.totalorder %s25, 0
      %p94 = por %p92, %p93
      %s96 = sadd.s32 %s95, 1
      %p99 = scmp.eq.s32.totalorder %s19, 1
      %p100 = scmp.ne.s32.totalorder %s95, %s97
      %p101 = scmp.eq.s32.totalorder %s19, 0
      %p102 = por %p100, %p101
      %p103 = scmp.ne.s32.totalorder %s95, %s97
      %p104 = scmp.eq.s32.totalorder %s24, 1
      %p105 = por %p103, %p104
      %p106 = scmp.ne.s32.totalorder %s97, %s98
      %p107 = scmp.eq.s32.totalorder %s24, 0
      %p108 = por %p106, %p107
      %p109 = scmp.ne.s32.totalorder %s97, %s98
      %p110 = scmp.eq.s32.totalorder %s25, 1
      %p111 = por %p109, %p110
      %p113 = scmp.ne.s32.totalorder %s98, %s112
      %p114 = scmp.eq.s32.totalorder %s25, 0
      %p115 = por %p113, %p114
      %s117 = sadd.s32 %s116, 1
      %p120 = scmp.eq.s32.totalorder %s19, 1
      %p121 = scmp.ne.s32.totalorder %s116, %s118
      %p122 = scmp.eq.s32.totalorder %s19, 0
      %p123 = por %p121, %p122
      %p124 = scmp.ne.s32.totalorder %s116, %s118
      %p125 = scmp.eq.s32.totalorder %s24, 1
      %p126 = por %p124, %p125
      %p127 = scmp.ne.s32.totalorder %s118, %s119
      %p128 = scmp.eq.s32.totalorder %s24, 0
      %p129 = por %p127, %p128
      %p130 = scmp.ne.s32.totalorder %s118, %s119
      %p131 = scmp.eq.s32.totalorder %s25, 1
      %p132 = por %p130, %p131
      %p134 = scmp.ne.s32.totalorder %s119, %s133
      %p135 = scmp.eq.s32.totalorder %s25, 0
      %p136 = por %p134, %p135
      %s137 = ssub.s32 %s19, %s26
      %p138 = scmp.eq.s32.totalorder %s137, 0
      %s140 = sadd.s32 %s139, 1
      %s141 = scalar_select %p138, %s139, %s140
      %p144 = pneg %p138
      %p145 = scmp.eq.s32.totalorder %s19, 1
      %p146 = por %p144, %p145
      %p147 = scmp.ne.s32.totalorder %s139, %s142
      %p148 = scmp.eq.s32.totalorder %s19, 0
      %p149 = por %p147, %p148
      %p150 = scmp.ne.s32.totalorder %s139, %s142
      %p151 = scmp.eq.s32.totalorder %s24, 1
      %p152 = por %p150, %p151
      %p153 = scmp.ne.s32.totalorder %s142, %s143
      %p154 = scmp.eq.s32.totalorder %s24, 0
      %p155 = por %p153, %p154
      %p156 = scmp.ne.s32.totalorder %s142, %s143
      %p157 = scmp.eq.s32.totalorder %s25, 1
      %p158 = por %p156, %p157
      %p160 = scmp.ne.s32.totalorder %s143, %s159
      %p161 = scmp.eq.s32.totalorder %s25, 0
      %p162 = por %p160, %p161
      %p163 = scmp.le.s32.totalorder 1, %s19
      %p164 = scmp.lt.s32.totalorder %s19, 3
      %p165 = pnand %p163, %p164
      %p166 = pneg %p165
      // Predicated region
      $region9: #{tpu_custom_call.1} parent=5 // pred_check
        _
      $region10: #{tpu_custom_call.1} parent=5 // pred_check_branch
        %168 = sbr.rel (%p165) target = $region12
      $region11: #{tpu_custom_call.1} parent=5 // pred_region
        %s169 = ssub.s32 %s19, 1
        // Predicated region
        $region13: #{tpu_custom_call.1} parent=11 // pred_check
          %p170 = pneg %p66
        $region14: #{tpu_custom_call.1} parent=11 // pred_check_branch
          %172 = sbr.rel (%p170) target = $region16
        $region15: #{tpu_custom_call.1} parent=11 // pred_region
          _
        $region16: #{tpu_custom_call.1} parent=11 // pred_fallthru
          _
        // Predicated region
        $region17: #{tpu_custom_call.1} parent=11 // pred_check
          %p173 = pneg %p87
        $region18: #{tpu_custom_call.1} parent=11 // pred_check_branch
          %175 = sbr.rel (%p173) target = $region20
        $region19: #{tpu_custom_call.1} parent=11 // pred_region
          %s177 = ssub.s32 1024, 1024
          %178 = vsyncadd [#allocation6], %s177
          %s179 = sshll.u32 [#allocation5], 4
          %s180 = int_to_ptr.vmem [resolvable:$true] %s179
          %185 = dma.hbm_to_vmem [thread:$0]  %s2, 1024, %s180, [#allocation6], 128, 128, 8
        $region20: #{tpu_custom_call.1} parent=11 // pred_fallthru
          _
        // Predicated region
        $region21: #{tpu_custom_call.1} parent=11 // pred_check
          %p186 = pneg %p108
        $region22: #{tpu_custom_call.1} parent=11 // pred_check_branch
          %188 = sbr.rel (%p186) target = $region24
        $region23: #{tpu_custom_call.1} parent=11 // pred_region
          %s190 = ssub.s32 512, 512
          %191 = vsyncadd [#allocation6], %s190
          %s192 = sshll.u32 [#allocation7], 4
          %s193 = int_to_ptr.vmem [resolvable:$true] %s192
          %198 = dma.hbm_to_vmem [thread:$0]  %s3, 512, %s193, [#allocation6], 128, 128, 8
        $region24: #{tpu_custom_call.1} parent=11 // pred_fallthru
          _
        // Predicated region
        $region25: #{tpu_custom_call.1} parent=11 // pred_check
          %p199 = pneg %p129
        $region26: #{tpu_custom_call.1} parent=11 // pred_check_branch
          %201 = sbr.rel (%p199) target = $region28
        $region27: #{tpu_custom_call.1} parent=11 // pred_region
          %s203 = ssub.s32 256, 256
          %204 = vsyncadd [#allocation9], %s203
          %s205 = sshll.u32 [#allocation8], 4
          %s206 = int_to_ptr.vmem [resolvable:$true] %s205
          %211 = dma.hbm_to_vmem [thread:$0]  %s4, 256, %s206, [#allocation9], 128, 128, 8
        $region28: #{tpu_custom_call.1} parent=11 // pred_fallthru
          _
      $region12: #{tpu_custom_call.1} parent=5 // pred_fallthru
        _
      %p212 = scmp.lt.s32.totalorder %s19, 2
      // Predicated region
      $region29: #{tpu_custom_call.1} parent=5 // pred_check
        %p213 = pneg %p212
      $region30: #{tpu_custom_call.1} parent=5 // pred_check_branch
        %215 = sbr.rel (%p213) target = $region32
      $region31: #{tpu_custom_call.1} parent=5 // pred_region
        // Predicated region
        $region33: #{tpu_custom_call.1} parent=31 // pred_check
          %p216 = pneg %p39
        $region34: #{tpu_custom_call.1} parent=31 // pred_check_branch
          %218 = sbr.rel (%p216) target = $region36
        $region35: #{tpu_custom_call.1} parent=31 // pred_region
          %s219 = sand.u32 %s29, 1
          %s220 = scalar_lea.sflag [#allocation3], %s219
          %s221 = sand.u32 %s29, 1
          %s222 = smul.addr %s221, 8
          %s223 = scalar_lea.vmem [#allocation2], %s222
          %s225 = ssub.s32 128, 128
          %226 = vsyncadd %s220, %s225
          %s227 = smul.addr %s19, 128
          %s228 = scalar_lea.hbm %s0, %s227
          %s230 = sshll.u32 %s223, 4
          %s231 = int_to_ptr.vmem [resolvable:$true] %s230
          %233 = dma.hbm_to_vmem [thread:$0]  %s228, 128, %s231, %s220
        $region36: #{tpu_custom_call.1} parent=31 // pred_fallthru
          _
      $region32: #{tpu_custom_call.1} parent=5 // pred_fallthru
        _
      %p234 = scmp.le.s32.totalorder 1, %s19
      %p235 = scmp.lt.s32.totalorder %s19, 3
      %p236 = pnand %p234, %p235
      %p237 = pneg %p236
      // Predicated region
      $region37: #{tpu_custom_call.1} parent=5 // pred_check
        _
      $region38: #{tpu_custom_call.1} parent=5 // pred_check_branch
        %239 = sbr.rel (%p236) target = $region40
      $region39: #{tpu_custom_call.1} parent=5 // pred_region
        %s240 = ssub.s32 %s19, 1
        %s241 = sand.u32 %s32, 1
        %s242 = scalar_lea.sflag [#allocation3], %s241
        %s243 = sand.u32 %s32, 1
        %s244 = smul.addr %s243, 8
        %s245 = scalar_lea.vmem [#allocation2], %s244
        // Predicated region
        $region41: #{tpu_custom_call.1} parent=39 // pred_check
          %p246 = pneg %p45
        $region42: #{tpu_custom_call.1} parent=39 // pred_check_branch
          %248 = sbr.rel (%p246) target = $region44
        $region43: #{tpu_custom_call.1} parent=39 // pred_region
          %249 = dma.done %s242, 128
        $region44: #{tpu_custom_call.1} parent=39 // pred_fallthru
          _
        // Predicated region
        $region45: #{tpu_custom_call.1} parent=39 // pred_check
          %p250 = pneg %p87
        $region46: #{tpu_custom_call.1} parent=39 // pred_check_branch
          %252 = sbr.rel (%p250) target = $region48
        $region47: #{tpu_custom_call.1} parent=39 // pred_region
          %253 = dma.done [#allocation6], 1024
        $region48: #{tpu_custom_call.1} parent=39 // pred_fallthru
          _
        // Predicated region
        $region49: #{tpu_custom_call.1} parent=39 // pred_check
          %p254 = pneg %p108
        $region50: #{tpu_custom_call.1} parent=39 // pred_check_branch
          %256 = sbr.rel (%p254) target = $region52
        $region51: #{tpu_custom_call.1} parent=39 // pred_region
          %257 = dma.done [#allocation6], 512
        $region52: #{tpu_custom_call.1} parent=39 // pred_fallthru
          _
        // Predicated region
        $region53: #{tpu_custom_call.1} parent=39 // pred_check
          %p258 = pneg %p129
        $region54: #{tpu_custom_call.1} parent=39 // pred_check_branch
          %260 = sbr.rel (%p258) target = $region56
        $region55: #{tpu_custom_call.1} parent=39 // pred_region
          %261 = dma.done [#allocation9], 256
        $region56: #{tpu_custom_call.1} parent=39 // pred_fallthru
          _
        %s262 = sand.u32 %s32, 1
        %s263 = scalar_lea.sflag [#allocation3], %s262
        %s264 = sand.u32 %s32, 1
        %s265 = smul.addr %s264, 8
        %s266 = scalar_lea.vmem [#allocation2], %s265
        %p267 = pneg %p45
        %p268 = pneg %p42
        %p269 = pneg %p66
        %p270 = pneg %p63
        %p271 = pneg %p87
        %p272 = pneg %p84
        %p273 = pneg %p108
        %p274 = pneg %p105
        %p275 = pneg %p129
        %p276 = pneg %p126
        %p277 = pneg %p155
        %p278 = pneg %p152
        %s279 = sand.u32 %s142, 1
        %s280 = scalar_lea.sflag [#allocation4], %s279
        %s281 = sand.u32 %s142, 1
        %s282 = smul.addr %s281, 8
        %s283 = scalar_lea.vmem [#allocation10], %s282
        %v284 = vld [vmem:[%s245] sm:$0xff]
        %v285 = vmul.f32 %v284, %v284
        %vm286 = vcmask 523264
        %v287 = vsel %vm286, %v285, 0.0
        %288 = vadd.xlane.f32.xlu0 %v287
        %v289 = vpop.xlane.xlu0 %288
        %v290 = vrcp.pop 64.0
        %v291 = vmul.f32 %v289, %v290
        %v292 = vadd.f32 %v291, 1e-06
        %v293 = vrsqrt.pop %v292
        %v294 = vmul.f32 %v284, %v293
        %v295 = vld [vmem:[%s1] sm:$0x1]
        %v297 = vlaneseq
        %v298 = vshrl.u32 %v297, 7
        %v299 = vsub.s32 0, %v298
        %v300 = vrot.slane %v295, %v299
        %v302 = vmul.f32 %v294, %v300
        %v303 = vld [vmem:[#allocation5] sm:$0xff]
        %v304 = vld [vmem:[#allocation5 + $0x8] sm:$0xff]
        %v305 = vld [vmem:[#allocation5 + $0x10] sm:$0xff]
        %v306 = vld [vmem:[#allocation5 + $0x18] sm:$0xff]
        %v307 = vld [vmem:[#allocation5 + $0x20] sm:$0xff]
        %v308 = vld [vmem:[#allocation5 + $0x28] sm:$0xff]
        %v309 = vld [vmem:[#allocation5 + $0x30] sm:$0xff]
        %v310 = vld [vmem:[#allocation5 + $0x38] sm:$0xff]
        %v312 = vsel %vm286, %v302, 0
        %314 = vmatprep.subr.mxu0 0.0
        %315 = vmatpush1.msra.mxu0 0.0
        %316 = vmatprep.subr.mxu0 0.0
        %317 = vmatpush1.msra.mxu0 0.0
        %318 = vmatprep.subr.mxu0 0.0
        %319 = vmatpush1.msra.mxu0 0.0
        %320 = vmatprep.subr.mxu0 0.0
        %321 = vmatpush1.msra.mxu0 0.0
        %322 = vmatprep.subr.mxu0 0.0
        %323 = vmatpush1.msra.mxu0 0.0
        %324 = vmatprep.subr.mxu0 0.0
        %325 = vmatpush1.msra.mxu0 0.0
        %326 = vmatprep.subr.mxu0 0.0
        %327 = vmatpush1.msra.mxu0 0.0
        %328 = vmatprep.subr.mxu0 0.0
        %329 = vmatpush1.msra.mxu0 0.0
        %330 = vmatprep.subr.mxu0 0.0
        %331 = vmatpush1.msra.mxu0 %v310
        %332 = vmatprep.subr.mxu0 0.0
        %333 = vmatpush1.msra.mxu0 %v309
        %334 = vmatprep.subr.mxu0 0.0
        %335 = vmatpush1.msra.mxu0 %v308
        %336 = vmatprep.subr.mxu0 0.0
        %337 = vmatpush1.msra.mxu0 %v307
        %338 = vmatprep.subr.mxu0 0.0
        %339 = vmatpush1.msra.mxu0 %v306
        %340 = vmatprep.subr.mxu0 0.0
        %341 = vmatpush1.msra.mxu0 %v305
        %342 = vmatprep.subr.mxu0 0.0
        %343 = vmatpush1.msra.mxu0 %v304
        %344 = vmatprep.subr.mxu0 0.0
        %345 = vmatpush1.msra.mxu0 %v303
        %346 = vmatprep.subr.mxu0 0.0
        %347 = vmatpush2.msra.mxu0 0.0
        %348 = vmatprep.subr.mxu0 0.0
        %349 = vmatpush2.msra.mxu0 0.0
        %350 = vmatprep.subr.mxu0 0.0
        %351 = vmatpush2.msra.mxu0 0.0
        %352 = vmatprep.subr.mxu0 0.0
        %353 = vmatpush2.msra.mxu0 0.0
        %354 = vmatprep.subr.mxu0 0.0
        %355 = vmatpush2.msra.mxu0 0.0
        %356 = vmatprep.subr.mxu0 0.0
        %357 = vmatpush2.msra.mxu0 0.0
        %358 = vmatprep.subr.mxu0 0.0
        %359 = vmatpush2.msra.mxu0 0.0
        %360 = vmatprep.subr.mxu0 0.0
        %361 = vmatpush2.msra.mxu0 0.0
        %362 = vmatprep.subr.mxu0 0.0
        %363 = vmatpush2.msra.mxu0 0.0
        %364 = vmatprep.subr.mxu0 0.0
        %365 = vmatpush2.msra.mxu0 0.0
        %366 = vmatprep.subr.mxu0 0.0
        %367 = vmatpush2.msra.mxu0 0.0
        %368 = vmatprep.subr.mxu0 0.0
        %369 = vmatpush2.msra.mxu0 0.0
        %370 = vmatprep.subr.mxu0 0.0
        %371 = vmatpush2.msra.mxu0 0.0
        %372 = vmatprep.subr.mxu0 0.0
        %373 = vmatpush2.msra.mxu0 0.0
        %374 = vmatprep.subr.mxu0 0.0
        %375 = vmatpush2.msra.mxu0 0.0
        %376 = vmatprep.subr.mxu0 0.0
        %377 = vmatpush2.msra.mxu0 0.0
        %378 = vmatprep.mubr.f32.mxu0 0.0
        %379 = vmatmul.mubr.f32.gmra.mxu0 %v312
        %v380 = vpop.f32.mrf.mxu0
        %v381 = vadd.f32 0.0, %v380
        %v382 = vpop.f32.mrf.mxu0
        %383 = vdwg.mxu0
        %v384 = vmul.f32 %v381, 0.25
        %v385 = vlaneseq
        %v386 = vshrl.u32 %v385, 7
        %v387 = vlaneseq
        %v388 = vand.u32 %v387, 127
        %vm389 = vcmp.gt.s32.totalorder %v388, %v386
        %v390 = vld [vmem:[#allocation8] sm:$0xff]
        %392 = vrot.lane.b32.xlu0 %v381, 96
        %v393 = vpop.permute.xlu0 %392
        %vm394 = vcmask 130048
        %v396 = vsel %vm394, %v384, 0
        %v398 = vsel %vm394, %v393, 0
        %400 = vmatprep.subr.mxu0 0.0
        %401 = vmatpush1.xpose.msra.mxu0 0.0
        %402 = vmatprep.subr.mxu0 0.0
        %403 = vmatpush1.xpose.msra.mxu0 0.0
        %404 = vmatprep.subr.mxu0 0.0
        %405 = vmatpush1.xpose.msra.mxu0 0.0
        %406 = vmatprep.subr.mxu0 0.0
        %407 = vmatpush1.xpose.msra.mxu0 0.0
        %408 = vmatprep.subr.mxu0 0.0
        %409 = vmatpush1.xpose.msra.mxu0 0.0
        %410 = vmatprep.subr.mxu0 0.0
        %411 = vmatpush1.xpose.msra.mxu0 0.0
        %412 = vmatprep.subr.mxu0 0.0
        %413 = vmatpush1.xpose.msra.mxu0 0.0
        %414 = vmatprep.subr.mxu0 0.0
        %415 = vmatpush1.xpose.msra.mxu0 0.0
        %416 = vmatprep.subr.mxu0 0.0
        %417 = vmatpush1.xpose.msra.mxu0 0.0
        %418 = vmatprep.subr.mxu0 0.0
        %419 = vmatpush1.xpose.msra.mxu0 0.0
        %420 = vmatprep.subr.mxu0 0.0
        %421 = vmatpush1.xpose.msra.mxu0 0.0
        %422 = vmatprep.subr.mxu0 0.0
        %423 = vmatpush1.xpose.msra.mxu0 0.0
        %424 = vmatprep.subr.mxu0 0.0
        %425 = vmatpush1.xpose.msra.mxu0 0.0
        %426 = vmatprep.subr.mxu0 0.0
        %427 = vmatpush1.xpose.msra.mxu0 0.0
        %428 = vmatprep.subr.mxu0 0.0
        %429 = vmatpush1.xpose.msra.mxu0 0.0
        %430 = vmatprep.subr.mxu0 0.0
        %431 = vmatpush1.xpose.msra.mxu0 %v398
        %432 = vmatprep.subr.mxu0 0.0
        %433 = vmatpush2.xpose.msra.mxu0 0.0
        %434 = vmatprep.subr.mxu0 0.0
        %435 = vmatpush2.xpose.msra.mxu0 0.0
        %436 = vmatprep.subr.mxu0 0.0
        %437 = vmatpush2.xpose.msra.mxu0 0.0
        %438 = vmatprep.subr.mxu0 0.0
        %439 = vmatpush2.xpose.msra.mxu0 0.0
        %440 = vmatprep.subr.mxu0 0.0
        %441 = vmatpush2.xpose.msra.mxu0 0.0
        %442 = vmatprep.subr.mxu0 0.0
        %443 = vmatpush2.xpose.msra.mxu0 0.0
        %444 = vmatprep.subr.mxu0 0.0
        %445 = vmatpush2.xpose.msra.mxu0 0.0
        %446 = vmatprep.subr.mxu0 0.0
        %447 = vmatpush2.xpose.msra.mxu0 0.0
        %448 = vmatprep.subr.mxu0 0.0
        %449 = vmatpush2.xpose.msra.mxu0 0.0
        %450 = vmatprep.subr.mxu0 0.0
        %451 = vmatpush2.xpose.msra.mxu0 0.0
        %452 = vmatprep.subr.mxu0 0.0
        %453 = vmatpush2.xpose.msra.mxu0 0.0
        %454 = vmatprep.subr.mxu0 0.0
        %455 = vmatpush2.xpose.msra.mxu0 0.0
        %456 = vmatprep.subr.mxu0 0.0
        %457 = vmatpush2.xpose.msra.mxu0 0.0
        %458 = vmatprep.subr.mxu0 0.0
        %459 = vmatpush2.xpose.msra.mxu0 0.0
        %460 = vmatprep.subr.mxu0 0.0
        %461 = vmatpush2.xpose.msra.mxu0 0.0
        %462 = vmatprep.subr.mxu0 0.0
        %463 = vmatpush2.xpose.msra.mxu0 0.0
        %464 = vmatprep.mubr.f32.mxu0 0.0
        %465 = vmatmul.mubr.f32.gmra.mxu0 %v396
        %v466 = vpop.f32.mrf.mxu0
        %v467 = vadd.f32 %v390, %v466
        %v468 = vpop.f32.mrf.mxu0
        %469 = vdwg.mxu0
        %v470 = vsel %vm389, -3.4028235e+38, %v467
        %vm471 = vcmask 64512
        %v472 = vsel %vm471, %v470, -inf
        %473 = vmax.xlane.f32.xlu0 %v472
        %v474 = vpop.xlane.xlu0 %473
        %v475 = vsub.f32 %v470, %v474
        %v476 = vmul.f32 %v475, 1.442695
        %v477 = vpow.pop %v476
        %v478 = vsel %vm471, %v477, 0.0
        %479 = vadd.xlane.f32.xlu0 %v478
        %v480 = vpop.xlane.xlu0 %479
        %v481 = vrcp.pop %v480
        %v482 = vmul.f32 %v477, %v481
        %483 = vrot.lane.b32.xlu0 %v381, 64
        %v484 = vpop.permute.xlu0 %483
        %v487 = vsel %vm471, %v482, 0
        %489 = vmatprep.subr.mxu0 0.0
        %490 = vmatpush1.msra.mxu0 0.0
        %491 = vmatprep.subr.mxu0 0.0
        %492 = vmatpush1.msra.mxu0 0.0
        %493 = vmatprep.subr.mxu0 0.0
        %494 = vmatpush1.msra.mxu0 0.0
        %495 = vmatprep.subr.mxu0 0.0
        %496 = vmatpush1.msra.mxu0 0.0
        %497 = vmatprep.subr.mxu0 0.0
        %498 = vmatpush1.msra.mxu0 0.0
        %499 = vmatprep.subr.mxu0 0.0
        %500 = vmatpush1.msra.mxu0 0.0
        %501 = vmatprep.subr.mxu0 0.0
        %502 = vmatpush1.msra.mxu0 0.0
        %503 = vmatprep.subr.mxu0 0.0
        %504 = vmatpush1.msra.mxu0 0.0
        %505 = vmatprep.subr.mxu0 0.0
        %506 = vmatpush1.msra.mxu0 0.0
        %507 = vmatprep.subr.mxu0 0.0
        %508 = vmatpush1.msra.mxu0 0.0
        %509 = vmatprep.subr.mxu0 0.0
        %510 = vmatpush1.msra.mxu0 0.0
        %511 = vmatprep.subr.mxu0 0.0
        %512 = vmatpush1.msra.mxu0 0.0
        %513 = vmatprep.subr.mxu0 0.0
        %514 = vmatpush1.msra.mxu0 0.0
        %515 = vmatprep.subr.mxu0 0.0
        %516 = vmatpush1.msra.mxu0 0.0
        %517 = vmatprep.subr.mxu0 0.0
        %518 = vmatpush1.msra.mxu0 0.0
        %519 = vmatprep.subr.mxu0 0.0
        %520 = vmatpush1.msra.mxu0 %v484
        %521 = vmatprep.subr.mxu0 0.0
        %522 = vmatpush2.msra.mxu0 0.0
        %523 = vmatprep.subr.mxu0 0.0
        %524 = vmatpush2.msra.mxu0 0.0
        %525 = vmatprep.subr.mxu0 0.0
        %526 = vmatpush2.msra.mxu0 0.0
        %527 = vmatprep.subr.mxu0 0.0
        %528 = vmatpush2.msra.mxu0 0.0
        %529 = vmatprep.subr.mxu0 0.0
        %530 = vmatpush2.msra.mxu0 0.0
        %531 = vmatprep.subr.mxu0 0.0
        %532 = vmatpush2.msra.mxu0 0.0
        %533 = vmatprep.subr.mxu0 0.0
        %534 = vmatpush2.msra.mxu0 0.0
        %535 = vmatprep.subr.mxu0 0.0
        %536 = vmatpush2.msra.mxu0 0.0
        %537 = vmatprep.subr.mxu0 0.0
        %538 = vmatpush2.msra.mxu0 0.0
        %539 = vmatprep.subr.mxu0 0.0
        %540 = vmatpush2.msra.mxu0 0.0
        %541 = vmatprep.subr.mxu0 0.0
        %542 = vmatpush2.msra.mxu0 0.0
        %543 = vmatprep.subr.mxu0 0.0
        %544 = vmatpush2.msra.mxu0 0.0
        %545 = vmatprep.subr.mxu0 0.0
        %546 = vmatpush2.msra.mxu0 0.0
        %547 = vmatprep.subr.mxu0 0.0
        %548 = vmatpush2.msra.mxu0 0.0
        %549 = vmatprep.subr.mxu0 0.0
        %550 = vmatpush2.msra.mxu0 0.0
        %551 = vmatprep.subr.mxu0 0.0
        %552 = vmatpush2.msra.mxu0 0.0
        %553 = vmatprep.mubr.f32.mxu0 0.0
        %554 = vmatmul.mubr.f32.gmra.mxu0 %v487
        %v555 = vpop.f32.mrf.mxu0
        %v556 = vadd.f32 0.0, %v555
        %v557 = vpop.f32.mrf.mxu0
        %558 = vdwg.mxu0
        %s559 = scalar_lea.vmem [#allocation8], 8
        %v560 = vld [vmem:[%s559] sm:$0xff]
        %561 = vrot.lane.b32.xlu0 %v384, 112
        %v562 = vpop.permute.xlu0 %561
        %563 = vrot.lane.b32.xlu0 %v381, 80
        %v564 = vpop.permute.xlu0 %563
        %v565 = vsel %vm394, %v562, 0
        %v567 = vsel %vm394, %v564, 0
        %569 = vmatprep.subr.mxu0 0.0
        %570 = vmatpush1.xpose.msra.mxu0 0.0
        %571 = vmatprep.subr.mxu0 0.0
        %572 = vmatpush1.xpose.msra.mxu0 0.0
        %573 = vmatprep.subr.mxu0 0.0
        %574 = vmatpush1.xpose.msra.mxu0 0.0
        %575 = vmatprep.subr.mxu0 0.0
        %576 = vmatpush1.xpose.msra.mxu0 0.0
        %577 = vmatprep.subr.mxu0 0.0
        %578 = vmatpush1.xpose.msra.mxu0 0.0
        %579 = vmatprep.subr.mxu0 0.0
        %580 = vmatpush1.xpose.msra.mxu0 0.0
        %581 = vmatprep.subr.mxu0 0.0
        %582 = vmatpush1.xpose.msra.mxu0 0.0
        %583 = vmatprep.subr.mxu0 0.0
        %584 = vmatpush1.xpose.msra.mxu0 0.0
        %585 = vmatprep.subr.mxu0 0.0
        %586 = vmatpush1.xpose.msra.mxu0 0.0
        %587 = vmatprep.subr.mxu0 0.0
        %588 = vmatpush1.xpose.msra.mxu0 0.0
        %589 = vmatprep.subr.mxu0 0.0
        %590 = vmatpush1.xpose.msra.mxu0 0.0
        %591 = vmatprep.subr.mxu0 0.0
        %592 = vmatpush1.xpose.msra.mxu0 0.0
        %593 = vmatprep.subr.mxu0 0.0
        %594 = vmatpush1.xpose.msra.mxu0 0.0
        %595 = vmatprep.subr.mxu0 0.0
        %596 = vmatpush1.xpose.msra.mxu0 0.0
        %597 = vmatprep.subr.mxu0 0.0
        %598 = vmatpush1.xpose.msra.mxu0 0.0
        %599 = vmatprep.subr.mxu0 0.0
        %600 = vmatpush1.xpose.msra.mxu0 %v567
        %601 = vmatprep.subr.mxu0 0.0
        %602 = vmatpush2.xpose.msra.mxu0 0.0
        %603 = vmatprep.subr.mxu0 0.0
        %604 = vmatpush2.xpose.msra.mxu0 0.0
        %605 = vmatprep.subr.mxu0 0.0
        %606 = vmatpush2.xpose.msra.mxu0 0.0
        %607 = vmatprep.subr.mxu0 0.0
        %608 = vmatpush2.xpose.msra.mxu0 0.0
        %609 = vmatprep.subr.mxu0 0.0
        %610 = vmatpush2.xpose.msra.mxu0 0.0
        %611 = vmatprep.subr.mxu0 0.0
        %612 = vmatpush2.xpose.msra.mxu0 0.0
        %613 = vmatprep.subr.mxu0 0.0
        %614 = vmatpush2.xpose.msra.mxu0 0.0
        %615 = vmatprep.subr.mxu0 0.0
        %616 = vmatpush2.xpose.msra.mxu0 0.0
        %617 = vmatprep.subr.mxu0 0.0
        %618 = vmatpush2.xpose.msra.mxu0 0.0
        %619 = vmatprep.subr.mxu0 0.0
        %620 = vmatpush2.xpose.msra.mxu0 0.0
        %621 = vmatprep.subr.mxu0 0.0
        %622 = vmatpush2.xpose.msra.mxu0 0.0
        %623 = vmatprep.subr.mxu0 0.0
        %624 = vmatpush2.xpose.msra.mxu0 0.0
        %625 = vmatprep.subr.mxu0 0.0
        %626 = vmatpush2.xpose.msra.mxu0 0.0
        %627 = vmatprep.subr.mxu0 0.0
        %628 = vmatpush2.xpose.msra.mxu0 0.0
        %629 = vmatprep.subr.mxu0 0.0
        %630 = vmatpush2.xpose.msra.mxu0 0.0
        %631 = vmatprep.subr.mxu0 0.0
        %632 = vmatpush2.xpose.msra.mxu0 0.0
        %633 = vmatprep.mubr.f32.mxu0 0.0
        %634 = vmatmul.mubr.f32.gmra.mxu0 %v565
        %v635 = vpop.f32.mrf.mxu0
        %v636 = vadd.f32 %v560, %v635
        %v637 = vpop.f32.mrf.mxu0
        %638 = vdwg.mxu0
        %v639 = vsel %vm389, -3.4028235e+38, %v636
        %v640 = vsel %vm471, %v639, -inf
        %641 = vmax.xlane.f32.xlu0 %v640
        %v642 = vpop.xlane.xlu0 %641
        %v643 = vsub.f32 %v639, %v642
        %v644 = vmul.f32 %v643, 1.442695
        %v645 = vpow.pop %v644
        %v646 = vsel %vm471, %v645, 0.0
        %647 = vadd.xlane.f32.xlu0 %v646
        %v648 = vpop.xlane.xlu0 %647
        %v649 = vrcp.pop %v648
        %v650 = vmul.f32 %v645, %v649
        %651 = vrot.lane.b32.xlu0 %v381, 48
        %v652 = vpop.permute.xlu0 %651
        %v655 = vsel %vm471, %v650, 0
        %657 = vmatprep.subr.mxu0 0.0
        %658 = vmatpush1.msra.mxu0 0.0
        %659 = vmatprep.subr.mxu0 0.0
        %660 = vmatpush1.msra.mxu0 0.0
        %661 = vmatprep.subr.mxu0 0.0
        %662 = vmatpush1.msra.mxu0 0.0
        %663 = vmatprep.subr.mxu0 0.0
        %664 = vmatpush1.msra.mxu0 0.0
        %665 = vmatprep.subr.mxu0 0.0
        %666 = vmatpush1.msra.mxu0 0.0
        %667 = vmatprep.subr.mxu0 0.0
        %668 = vmatpush1.msra.mxu0 0.0
        %669 = vmatprep.subr.mxu0 0.0
        %670 = vmatpush1.msra.mxu0 0.0
        %671 = vmatprep.subr.mxu0 0.0
        %672 = vmatpush1.msra.mxu0 0.0
        %673 = vmatprep.subr.mxu0 0.0
        %674 = vmatpush1.msra.mxu0 0.0
        %675 = vmatprep.subr.mxu0 0.0
        %676 = vmatpush1.msra.mxu0 0.0
        %677 = vmatprep.subr.mxu0 0.0
        %678 = vmatpush1.msra.mxu0 0.0
        %679 = vmatprep.subr.mxu0 0.0
        %680 = vmatpush1.msra.mxu0 0.0
        %681 = vmatprep.subr.mxu0 0.0
        %682 = vmatpush1.msra.mxu0 0.0
        %683 = vmatprep.subr.mxu0 0.0
        %684 = vmatpush1.msra.mxu0 0.0
        %685 = vmatprep.subr.mxu0 0.0
        %686 = vmatpush1.msra.mxu0 0.0
        %687 = vmatprep.subr.mxu0 0.0
        %688 = vmatpush1.msra.mxu0 %v652
        %689 = vmatprep.subr.mxu0 0.0
        %690 = vmatpush2.msra.mxu0 0.0
        %691 = vmatprep.subr.mxu0 0.0
        %692 = vmatpush2.msra.mxu0 0.0
        %693 = vmatprep.subr.mxu0 0.0
        %694 = vmatpush2.msra.mxu0 0.0
        %695 = vmatprep.subr.mxu0 0.0
        %696 = vmatpush2.msra.mxu0 0.0
        %697 = vmatprep.subr.mxu0 0.0
        %698 = vmatpush2.msra.mxu0 0.0
        %699 = vmatprep.subr.mxu0 0.0
        %700 = vmatpush2.msra.mxu0 0.0
        %701 = vmatprep.subr.mxu0 0.0
        %702 = vmatpush2.msra.mxu0 0.0
        %703 = vmatprep.subr.mxu0 0.0
        %704 = vmatpush2.msra.mxu0 0.0
        %705 = vmatprep.subr.mxu0 0.0
        %706 = vmatpush2.msra.mxu0 0.0
        %707 = vmatprep.subr.mxu0 0.0
        %708 = vmatpush2.msra.mxu0 0.0
        %709 = vmatprep.subr.mxu0 0.0
        %710 = vmatpush2.msra.mxu0 0.0
        %711 = vmatprep.subr.mxu0 0.0
        %712 = vmatpush2.msra.mxu0 0.0
        %713 = vmatprep.subr.mxu0 0.0
        %714 = vmatpush2.msra.mxu0 0.0
        %715 = vmatprep.subr.mxu0 0.0
        %716 = vmatpush2.msra.mxu0 0.0
        %717 = vmatprep.subr.mxu0 0.0
        %718 = vmatpush2.msra.mxu0 0.0
        %719 = vmatprep.subr.mxu0 0.0
        %720 = vmatpush2.msra.mxu0 0.0
        %721 = vmatprep.mubr.f32.mxu0 0.0
        %722 = vmatmul.mubr.f32.gmra.mxu0 %v655
        %v723 = vpop.f32.mrf.mxu0
        %v724 = vadd.f32 0.0, %v723
        %v725 = vpop.f32.mrf.mxu0
        %726 = vdwg.mxu0
        %728 = vrot.lane.b32.xlu0 %v724, 16
        %v729 = vpop.permute.xlu0 %728
        %v731 = vsel %vm394, %v556, %v729
        %v732 = vld [vmem:[#allocation7] sm:$0xff]
        %v733 = vld [vmem:[#allocation7 + $0x8] sm:$0xff]
        %v734 = vld [vmem:[#allocation7 + $0x10] sm:$0xff]
        %v735 = vld [vmem:[#allocation7 + $0x18] sm:$0xff]
        %vm736 = vcmask 261120
        %v738 = vsel %vm736, %v731, 0
        %740 = vmatprep.subr.mxu0 0.0
        %741 = vmatpush1.msra.mxu0 0.0
        %742 = vmatprep.subr.mxu0 0.0
        %743 = vmatpush1.msra.mxu0 0.0
        %744 = vmatprep.subr.mxu0 0.0
        %745 = vmatpush1.msra.mxu0 0.0
        %746 = vmatprep.subr.mxu0 0.0
        %747 = vmatpush1.msra.mxu0 0.0
        %748 = vmatprep.subr.mxu0 0.0
        %749 = vmatpush1.msra.mxu0 0.0
        %750 = vmatprep.subr.mxu0 0.0
        %751 = vmatpush1.msra.mxu0 0.0
        %752 = vmatprep.subr.mxu0 0.0
        %753 = vmatpush1.msra.mxu0 0.0
        %754 = vmatprep.subr.mxu0 0.0
        %755 = vmatpush1.msra.mxu0 0.0
        %756 = vmatprep.subr.mxu0 0.0
        %757 = vmatpush1.msra.mxu0 0.0
        %758 = vmatprep.subr.mxu0 0.0
        %759 = vmatpush1.msra.mxu0 0.0
        %760 = vmatprep.subr.mxu0 0.0
        %761 = vmatpush1.msra.mxu0 0.0
        %762 = vmatprep.subr.mxu0 0.0
        %763 = vmatpush1.msra.mxu0 0.0
        %764 = vmatprep.subr.mxu0 0.0
        %765 = vmatpush1.msra.mxu0 %v735
        %766 = vmatprep.subr.mxu0 0.0
        %767 = vmatpush1.msra.mxu0 %v734
        %768 = vmatprep.subr.mxu0 0.0
        %769 = vmatpush1.msra.mxu0 %v733
        %770 = vmatprep.subr.mxu0 0.0
        %771 = vmatpush1.msra.mxu0 %v732
        %772 = vmatprep.subr.mxu0 0.0
        %773 = vmatpush2.msra.mxu0 0.0
        %774 = vmatprep.subr.mxu0 0.0
        %775 = vmatpush2.msra.mxu0 0.0
        %776 = vmatprep.subr.mxu0 0.0
        %777 = vmatpush2.msra.mxu0 0.0
        %778 = vmatprep.subr.mxu0 0.0
        %779 = vmatpush2.msra.mxu0 0.0
        %780 = vmatprep.subr.mxu0 0.0
        %781 = vmatpush2.msra.mxu0 0.0
        %782 = vmatprep.subr.mxu0 0.0
        %783 = vmatpush2.msra.mxu0 0.0
        %784 = vmatprep.subr.mxu0 0.0
        %785 = vmatpush2.msra.mxu0 0.0
        %786 = vmatprep.subr.mxu0 0.0
        %787 = vmatpush2.msra.mxu0 0.0
        %788 = vmatprep.subr.mxu0 0.0
        %789 = vmatpush2.msra.mxu0 0.0
        %790 = vmatprep.subr.mxu0 0.0
        %791 = vmatpush2.msra.mxu0 0.0
        %792 = vmatprep.subr.mxu0 0.0
        %793 = vmatpush2.msra.mxu0 0.0
        %794 = vmatprep.subr.mxu0 0.0
        %795 = vmatpush2.msra.mxu0 0.0
        %796 = vmatprep.subr.mxu0 0.0
        %797 = vmatpush2.msra.mxu0 0.0
        %798 = vmatprep.subr.mxu0 0.0
        %799 = vmatpush2.msra.mxu0 0.0
        %800 = vmatprep.subr.mxu0 0.0
        %801 = vmatpush2.msra.mxu0 0.0
        %802 = vmatprep.subr.mxu0 0.0
        %803 = vmatpush2.msra.mxu0 0.0
        %804 = vmatprep.mubr.f32.mxu0 0.0
        %805 = vmatmul.mubr.f32.gmra.mxu0 %v738
        %v806 = vpop.f32.mrf.mxu0
        %v807 = vadd.f32 %v284, %v806
        %v808 = vpop.f32.mrf.mxu0
        %809 = vdwg.mxu0
        %810 = vst.msk [vmem:[%s283] sm:$0xff] %vm286, %v807
        %s811 = sand.u32 %s142, 1
        %s812 = scalar_lea.sflag [#allocation4], %s811
        %s813 = sand.u32 %s142, 1
        %s814 = smul.addr %s813, 8
        %s815 = scalar_lea.vmem [#allocation10], %s814
        // Predicated region
        $region57: #{tpu_custom_call.1} parent=39 // pred_check
          %p816 = pneg %p152
        $region58: #{tpu_custom_call.1} parent=39 // pred_check_branch
          %818 = sbr.rel (%p816) target = $region60
        $region59: #{tpu_custom_call.1} parent=39 // pred_region
          %s820 = ssub.s32 128, 128
          %821 = vsyncadd %s812, %s820
          %s822 = smul.addr %s24, 128
          %s823 = scalar_lea.hbm %s5, %s822
          %s825 = sshll.u32 %s815, 4
          %s826 = int_to_ptr.vmem [resolvable:$true] %s825
          %828 = dma.vmem_to_hbm [thread:$0]  %s826, 128, %s823, %s812
        $region60: #{tpu_custom_call.1} parent=39 // pred_fallthru
          _
      $region40: #{tpu_custom_call.1} parent=5 // pred_fallthru
        _
      %p829 = scmp.le.s32.totalorder 2, %s19
      // Predicated region
      $region61: #{tpu_custom_call.1} parent=5 // pred_check
        %p830 = pneg %p829
      $region62: #{tpu_custom_call.1} parent=5 // pred_check_branch
        %832 = sbr.rel (%p830) target = $region64
      $region63: #{tpu_custom_call.1} parent=5 // pred_region
        %s833 = ssub.s32 %s19, 2
        // Predicated region
        $region65: #{tpu_custom_call.1} parent=63 // pred_check
          %p834 = pneg %p158
        $region66: #{tpu_custom_call.1} parent=63 // pred_check_branch
          %836 = sbr.rel (%p834) target = $region68
        $region67: #{tpu_custom_call.1} parent=63 // pred_region
          %s837 = sand.u32 %s143, 1
          %s838 = scalar_lea.sflag [#allocation4], %s837
          %s839 = sand.u32 %s143, 1
          %s840 = smul.addr %s839, 8
          %s841 = scalar_lea.vmem [#allocation10], %s840
          %842 = dma.done %s838, 128
        $region68: #{tpu_custom_call.1} parent=63 // pred_fallthru
          _
      $region64: #{tpu_custom_call.1} parent=5 // pred_fallthru
        _
    $region6: #{tpu_custom_call.1} parent=1 // loop_footer
      %s23 = sadd.s32 1, %s19
    $region7: #{tpu_custom_call.1} parent=1 // loop_footer_branch
      %18 = sbr.rel target = $region3
    $region8: #{tpu_custom_call.1} parent=1 // loop_exit
      _
    %843 = vsyncpa [#allocation3], 1
    %s844 = scalar_lea.sflag [#allocation3], 1
    %845 = vsyncpa %s844, 1
    %846 = vsyncpa [#allocation6], 1
    %847 = vsyncpa [#allocation9], 1
    %848 = vsyncpa [#allocation4], 1
    %s849 = scalar_lea.sflag [#allocation4], 1
    %850 = vsyncpa %s849, 1

</llo_original>
